<compile_context>
chip_gen: v5e
topology: v5e:2x2
jax: 0.10.0
libtpu: 0.0.40
codegen_flags: <defaults>
</compile_context>

<pallas_src>
import functools

import jax
import jax.numpy as jnp
from jax import lax
from jax.experimental import pallas as pl
from jax.experimental.pallas import tpu as pltpu


# Large finite negative instead of -inf: identical result for causal masking
# (exp underflows to exactly 0) but no NaN if a row were ever fully masked.
_MASK_VALUE = -0.7 * float(jnp.finfo(jnp.float32).max)


def _attention_head_kernel(x_ref, wqkv_ref, o_ref, *, head_size, decoder):
    # x_ref block: (bt, T, C); wqkv_ref: (C, 3H) resident; o_ref block: (bt, T, H)
    bt, T, C = x_ref.shape
    H = head_size

    # --- fused QKV projection: one MXU pass over all bt*T rows -------------
    # (leading-dim merge with the last dim unchanged: layout-preserving, free)
    x2d = x_ref[...].reshape(bt * T, C)                      # native dtype
    qkv = jnp.dot(x2d, wqkv_ref[...],
                  preferred_element_type=jnp.float32)        # (bt*T, 3H) f32
    qkv = qkv.reshape(bt, T, 3 * H)

    q = qkv[:, :, 0 * H:1 * H]      # (bt, T, H); Wq is pre-scaled by H**-0.5
    k = qkv[:, :, 1 * H:2 * H]
    v = qkv[:, :, 2 * H:3 * H]

    # --- scores: contract on last axis of both q and k (no materialized kT) -
    s = jnp.einsum('bqd,bkd->bqk', q, k,
                   preferred_element_type=jnp.float32)       # (bt, T, T)

    if decoder:
        row = lax.broadcasted_iota(jnp.int32, (T, T), 0)
        col = lax.broadcasted_iota(jnp.int32, (T, T), 1)
        causal = (col <= row)[None, :, :]                    # (1, T, T)
        s = jnp.where(causal, s, _MASK_VALUE)

    # --- softmax over last axis (f32); divide via EUP approx reciprocal ----
    m = jnp.max(s, axis=-1, keepdims=True)
    p = jnp.exp(s - m)
    denom = jnp.sum(p, axis=-1, keepdims=True)
    p = p * pl.reciprocal(denom, approx=True)

    out = jnp.einsum('bqk,bkd->bqd', p, v,
                     preferred_element_type=jnp.float32)     # (bt, T, H)
    o_ref[...] = out.astype(o_ref.dtype)

    # TODO(synk): attention-weight dropout not implemented (inference
    # semantics, dropout=None); would need pltpu.prng_seed + stateful_bernoulli.


def attention_head(x, wq, wk, wv, *, decoder=True, batch_tile=None):
    """x: (B, T, C); wq/wk/wv: (C, H).  Returns (B, T, H)."""
    B, T, C = x.shape
    H = wq.shape[1]

    if batch_tile is None:
        batch_tile = B            # toy shapes: the whole problem is one grid step
    assert B % batch_tile == 0, "batch_tile must divide B"

    # One-time parameter transform: fold the 1/sqrt(H) attention scale into Wq
    # and pack Q/K/V into a single (C, 3H) weight (single resident VMEM block,
    # single MXU pass with N = 3H instead of three N = H passes).
    w_qkv = jnp.concatenate([wq * (H ** -0.5), wk, wv], axis=1)

    kernel = functools.partial(_attention_head_kernel, head_size=H, decoder=decoder)

    itemsize = jnp.dtype(x.dtype).itemsize
    cost = pl.CostEstimate(
        flops=2 * B * T * C * 3 * H        # fused QKV projection
        + 2 * B * T * T * H                # q @ k^T
        + 2 * B * T * T * H,               # p @ v
        transcendentals=B * T * T + B * T,  # exp + reciprocal
        bytes_accessed=B * T * C * itemsize
        + C * 3 * H * itemsize
        + B * T * H * itemsize,
    )

    return pl.pallas_call(
        kernel,
        out_shape=jax.ShapeDtypeStruct((B, T, H), x.dtype),
        grid_spec=pltpu.PrefetchScalarGridSpec(
            num_scalar_prefetch=0,
            grid=(B // batch_tile,),
            in_specs=[
                pl.BlockSpec((batch_tile, T, C), lambda b: (b, 0, 0)),
                pl.BlockSpec((C, 3 * H), lambda b: (0, 0)),   # resident weights
            ],
            out_specs=pl.BlockSpec((batch_tile, T, H), lambda b: (b, 0, 0)),
        ),
        compiler_params=pltpu.CompilerParams(
            # batch-tile axis is independent -> shards across TensorCores
            dimension_semantics=("parallel",),
        ),
        cost_estimate=cost,
    )(x, w_qkv)


def _reference(x, wq, wk, wv, decoder=True):
    q = x @ wq
    k = x @ wk
    v = x @ wv
    s = (q @ jnp.swapaxes(k, -2, -1)) * (wq.shape[1] ** -0.5)
    if decoder:
        T = x.shape[1]
        mask = jnp.tril(jnp.ones((T, T)))
        s = jnp.where(mask == 0, -jnp.inf, s)
    p = jax.nn.softmax(s, axis=-1)
    return p @ v


if __name__ == "__main__":
    # Module hyperparams: context_size=8, embed_size=32, head_size=16
    B, T, C, H = 2, 8, 32, 16

    key = jax.random.PRNGKey(0)
    kx, kq, kk, kv = jax.random.split(key, 4)
    x = jax.random.normal(kx, (B, T, C), dtype=jnp.float32)
    # deterministic synthetic parameters (nn.Linear(embed_size, head_size, bias=False))
    wq = jax.random.normal(kq, (C, H), dtype=jnp.float32) * (C ** -0.5)
    wk = jax.random.normal(kk, (C, H), dtype=jnp.float32) * (C ** -0.5)
    wv = jax.random.normal(kv, (C, H), dtype=jnp.float32) * (C ** -0.5)

    out = attention_head(x, wq, wk, wv, decoder=True)
    out = jax.block_until_ready(out)

    ref = _reference(x, wq, wk, wv, decoder=True)
    assert out.shape == (B, T, H)
    # approx reciprocal (EUP) in the softmax denominator loosens the tolerance slightly
    assert jnp.allclose(out, ref, atol=2e-3, rtol=2e-3), "mismatch vs reference"

    print("KERNEL_OK")
</pallas_src>

<mosaic_0001>
module attributes {stable_mosaic.version = 11 : i64} {
  func.func @_attention_head_kernel(%arg0: i32, %arg1: memref<2x8x32xf32, #tpu.memory_space<vmem>>, %arg2: memref<32x48xf32, #tpu.memory_space<vmem>>, %arg3: memref<2x8x16xf32, #tpu.memory_space<vmem>>) attributes {dimension_semantics = [#tpu.dimension_semantics<parallel>], iteration_bounds = array<i64: 1>, scalar_prefetch = 0 : i64, scratch_operands = 0 : i64, tpu.core_type = #tpu.core_type<tc>, window_params = [{transform_indices = @transform_0, window_bounds = array<i64: 2, 8, 32>}, {pipeline_mode = #tpu.pipeline_mode<synchronous>, transform_indices = @transform_1, window_bounds = array<i64: 32, 48>}, {transform_indices = @transform_2, window_bounds = array<i64: 2, 8, 16>}]} {
    %c0 = arith.constant 0 : index
    %c0_0 = arith.constant 0 : index
    %c0_1 = arith.constant 0 : index
    %0 = vector.load %arg1[%c0, %c0_0, %c0_1] : memref<2x8x32xf32, #tpu.memory_space<vmem>>, vector<2x8x32xf32>
    %1 = vector.shape_cast %0 : vector<2x8x32xf32> to vector<16x32xf32>
    %c0_2 = arith.constant 0 : index
    %c0_3 = arith.constant 0 : index
    %2 = vector.load %arg2[%c0_2, %c0_3] : memref<32x48xf32, #tpu.memory_space<vmem>>, vector<32x48xf32>
    %cst = arith.constant dense<0.000000e+00> : vector<16x48xf32>
    %3 = tpu.matmul %1, %2, %cst {dimension_numbers = #tpu.dot_dimension_numbers<[1], [0], [0], [1], [0, 0, 1, 1], [], []>} : vector<16x32xf32>, vector<32x48xf32>, vector<16x48xf32> -> vector<16x48xf32>
    %4 = vector.shape_cast %3 : vector<16x48xf32> to vector<2x8x48xf32>
    %5 = vector.extract_strided_slice %4 {offsets = [0, 0, 0], sizes = [2, 8, 16], strides = [1, 1, 1]} : vector<2x8x48xf32> to vector<2x8x16xf32>
    %6 = vector.extract_strided_slice %4 {offsets = [0, 0, 16], sizes = [2, 8, 16], strides = [1, 1, 1]} : vector<2x8x48xf32> to vector<2x8x16xf32>
    %7 = vector.extract_strided_slice %4 {offsets = [0, 0, 32], sizes = [2, 8, 16], strides = [1, 1, 1]} : vector<2x8x48xf32> to vector<2x8x16xf32>
    "tpu.trace_start"() <{level = 10 : i32, message = "bqd,bkd->bqk"}> : () -> ()
    %cst_4 = arith.constant dense<0.000000e+00> : vector<2x8x8xf32>
    %8 = tpu.matmul %5, %6, %cst_4 {dimension_numbers = #tpu.dot_dimension_numbers<[2], [2], [1], [1], [0, 0, 0, 1, 1, 1], [0], [0]>} : vector<2x8x16xf32>, vector<2x8x16xf32>, vector<2x8x8xf32> -> vector<2x8x8xf32>
    "tpu.trace_stop"() : () -> ()
    %9 = tpu.iota {dimensions = array<i32: 0>} : vector<8x8xi32>
    %10 = tpu.iota {dimensions = array<i32: 1>} : vector<8x8xi32>
    %11 = arith.cmpi sle, %10, %9 : vector<8x8xi32>
    %12 = vector.shape_cast %11 : vector<8x8xi1> to vector<1x8x8xi1>
    %cst_5 = arith.constant -2.38197633E+38 : f32
    %13 = vector.shape_cast %12 : vector<1x8x8xi1> to vector<1x8x8xi1>
    %14 = vector.broadcast %13 : vector<1x8x8xi1> to vector<2x8x8xi1>
    %15 = vector.broadcast %cst_5 : f32 to vector<2x8x8xf32>
    %16 = arith.select %14, %8, %15 : vector<2x8x8xi1>, vector<2x8x8xf32>
    %cst_6 = arith.constant dense<0xFF800000> : vector<2x8xf32>
    %17 = vector.multi_reduction <maximumf>, %16, %cst_6 [2] : vector<2x8x8xf32> to vector<2x8xf32>
    %18 = vector.shape_cast %17 : vector<2x8xf32> to vector<2x8x1xf32>
    %19 = vector.broadcast %18 : vector<2x8x1xf32> to vector<2x8x8xf32>
    %20 = arith.subf %16, %19 : vector<2x8x8xf32>
    %21 = math.exp %20 : vector<2x8x8xf32>
    %cst_7 = arith.constant dense<0.000000e+00> : vector<2x8xf32>
    %22 = vector.multi_reduction <add>, %21, %cst_7 [2] : vector<2x8x8xf32> to vector<2x8xf32>
    %23 = vector.shape_cast %22 : vector<2x8xf32> to vector<2x8x1xf32>
    %24 = tpu.reciprocal %23 {approx = true} : vector<2x8x1xf32> -> vector<2x8x1xf32>
    %25 = vector.broadcast %24 : vector<2x8x1xf32> to vector<2x8x8xf32>
    %26 = arith.mulf %21, %25 : vector<2x8x8xf32>
    "tpu.trace_start"() <{level = 10 : i32, message = "bqk,bkd->bqd"}> : () -> ()
    %cst_8 = arith.constant dense<0.000000e+00> : vector<2x8x16xf32>
    %27 = tpu.matmul %26, %7, %cst_8 {dimension_numbers = #tpu.dot_dimension_numbers<[2], [1], [1], [2], [0, 0, 0, 1, 1, 2], [0], [0]>} : vector<2x8x8xf32>, vector<2x8x16xf32>, vector<2x8x16xf32> -> vector<2x8x16xf32>
    "tpu.trace_stop"() : () -> ()
    %c0_9 = arith.constant 0 : index
    %c0_10 = arith.constant 0 : index
    %c0_11 = arith.constant 0 : index
    %28 = vector.load %arg3[%c0_9, %c0_10, %c0_11] : memref<2x8x16xf32, #tpu.memory_space<vmem>>, vector<2x8x16xf32>
    tpu.vector_store %arg3[%c0_9, %c0_10, %c0_11], %27 {strides = array<i32>} : memref<2x8x16xf32, #tpu.memory_space<vmem>>, vector<2x8x16xf32>,
    return
  }
  func.func @transform_0(%arg0: i32) -> (i32, i32, i32) {
    %c0_i32 = arith.constant 0 : i32
    %c0_i32_0 = arith.constant 0 : i32
    %c0_i32_1 = arith.constant 0 : i32
    return %arg0, %c0_i32, %c0_i32_0 : i32, i32, i32
  }
  func.func @transform_1(%arg0: i32) -> (i32, i32) {
    %c0_i32 = arith.constant 0 : i32
    %c0_i32_0 = arith.constant 0 : i32
    %c0_i32_1 = arith.constant 0 : i32
    return %c0_i32, %c0_i32_0 : i32, i32
  }
  func.func @transform_2(%arg0: i32) -> (i32, i32, i32) {
    %c0_i32 = arith.constant 0 : i32
    %c0_i32_0 = arith.constant 0 : i32
    %c0_i32_1 = arith.constant 0 : i32
    return %arg0, %c0_i32, %c0_i32_0 : i32, i32, i32
  }
}

</mosaic_0001>

<llo_original>
// kernel: tpu_custom_call.1
$region0: #{tpu_custom_call.1}
  #allocation0 [shape = 'u32[]', space=smem, size = 0x4, offset = 0x4, fixed_abs, tag = 'smem constant byte address 0x4 - core index']
  #allocation1 [shape = 'u32[72,128]{1,0:T(1,128)}', space=vmem, size = 0x9000, scoped, tag = 'internal scratch']
  %s0 = inlined_call_operand.hbm [shape: f32[2,8,32], index: 0, kind: input, shape index: {}]
  %s1 = inlined_call_operand.hbm [shape: f32[32,48], index: 1, kind: input, shape index: {}]
  %s2 = inlined_call_operand.hbm [shape: f32[2,8,16], index: 2, kind: output, shape index: {}]
  %s3 = sld [smem:[#allocation0]]
  $region26: #{tpu_custom_call.1} parent=0
    _
  %s5 = ssub.s32 1, %s3
  %s6 = scalar_select 0, %s5, %s3
  $region1: #{tpu_custom_call.1} parent=0
    #allocation2 [shape = 'u8[8192]{0}', space=vmem, size = 0x2000, scoped, tag = 'input window, operand 0, single buffered']
    #allocation3 [shape = 's32[1]{0}', space=sflag, size = 0x4, scoped, tag = 'scoped memory for tpu_custom_call.1']
    #allocation4 [shape = 's32[1]{0}', space=sflag, size = 0x4, scoped, tag = 'scoped memory for tpu_custom_call.1']
    #allocation5 [shape = 'u8[16384]{0}', space=vmem, size = 0x4000, scoped, tag = 'input window, operand 1, single buffered']
    #allocation6 [shape = 's32[1]{0}', space=sflag, size = 0x4, scoped, tag = 'scoped memory for tpu_custom_call.1']
    #allocation7 [shape = 'u8[8192]{0}', space=vmem, size = 0x2000, scoped, tag = 'output window, operand 0, single buffered']
    %7 = vsyncpa [#allocation3], 0
    %8 = vsyncpa [#allocation6], 0
    %9 = vsyncpa [#allocation4], 0
    // Predicated region
    $region2: #{tpu_custom_call.1} parent=1 // pred_check
      _
    $region3: #{tpu_custom_call.1} parent=1 // pred_check_branch
      %11 = sbr.rel (0) target = $region5
    $region4: #{tpu_custom_call.1} parent=1 // pred_region
      %13 = vsyncadd [#allocation3], 0
      %s14 = sshll.u32 %s0, 4
      %s15 = int_to_ptr.hbm [resolvable:$true] %s14
      %s16 = sshll.u32 [#allocation2], 4
      %s17 = int_to_ptr.vmem [resolvable:$true] %s16
      %22 = dma.hbm_to_vmem [thread:$0]  %s15, 256, %s17, [#allocation3], 128, 128, 8
    $region5: #{tpu_custom_call.1} parent=1 // pred_fallthru
      _
    // Predicated region
    $region6: #{tpu_custom_call.1} parent=1 // pred_check
      _
    $region7: #{tpu_custom_call.1} parent=1 // pred_check_branch
      %24 = sbr.rel (0) target = $region9
    $region8: #{tpu_custom_call.1} parent=1 // pred_region
      %26 = vsyncadd [#allocation6], 0
      %s27 = sshll.u32 %s1, 4
      %s28 = int_to_ptr.hbm [resolvable:$true] %s27
      %s29 = sshll.u32 [#allocation5], 4
      %s30 = int_to_ptr.vmem [resolvable:$true] %s29
      %35 = dma.hbm_to_vmem [thread:$0]  %s28, 512, %s30, [#allocation6], 128, 128, 8
    $region9: #{tpu_custom_call.1} parent=1 // pred_fallthru
      _
    // Predicated region
    $region10: #{tpu_custom_call.1} parent=1 // pred_check
      _
    $region11: #{tpu_custom_call.1} parent=1 // pred_check_branch
      %37 = sbr.rel (0) target = $region13
    $region12: #{tpu_custom_call.1} parent=1 // pred_region
      %39 = dma.done [#allocation3], 256
    $region13: #{tpu_custom_call.1} parent=1 // pred_fallthru
      _
    // Predicated region
    $region14: #{tpu_custom_call.1} parent=1 // pred_check
      _
    $region15: #{tpu_custom_call.1} parent=1 // pred_check_branch
      %41 = sbr.rel (0) target = $region17
    $region16: #{tpu_custom_call.1} parent=1 // pred_region
      %43 = dma.done [#allocation6], 512
    $region17: #{tpu_custom_call.1} parent=1 // pred_fallthru
      _
    %v44 = vld [vmem:[#allocation2] sm:$0xff]
    %v45 = vld [vmem:[#allocation2 + $0x8] sm:$0xff]
    %v46 = vld [vmem:[#allocation5] sm:$0xff]
    %v47 = vld [vmem:[#allocation5 + $0x8] sm:$0xff]
    %v48 = vld [vmem:[#allocation5 + $0x10] sm:$0xff]
    %v49 = vld [vmem:[#allocation5 + $0x18] sm:$0xff]
    %vm50 = vcmask 261120
    %v52 = vsel %vm50, %v44, 0
    %v55 = vsel %vm50, %v45, 0
    %57 = vmatpush.msra.mxu0 0.0
    %58 = vmatpush.msra.mxu0 0.0
    %59 = vmatpush.msra.mxu0 0.0
    %60 = vmatpush.msra.mxu0 0.0
    %61 = vmatpush.msra.mxu0 0.0
    %62 = vmatpush.msra.mxu0 0.0
    %63 = vmatpush.msra.mxu0 0.0
    %64 = vmatpush.msra.mxu0 0.0
    %65 = vmatpush.msra.mxu0 0.0
    %66 = vmatpush.msra.mxu0 0.0
    %67 = vmatpush.msra.mxu0 0.0
    %68 = vmatpush.msra.mxu0 0.0
    %69 = vmatpush.msra.mxu0 %v49
    %70 = vmatpush.msra.mxu0 %v48
    %71 = vmatpush.msra.mxu0 %v47
    %72 = vmatpush.msra.mxu0 %v46
    %73 = vmatmul.f32.gmra.mxu0 %v52
    %v74 = vpop.f32.mrf.mxu0
    %v75 = vadd.f32 0.0, %v74
    %76 = vmatmul.f32.gmra.mxu0 %v55
    %v77 = vpop.f32.mrf.mxu0
    %v78 = vadd.f32 0.0, %v77
    %79 = vdwg.mxu0
    %81 = vrot.lane.b32.xlu0 %v75, 112
    %v82 = vpop.permute.xlu0 %81
    %vm83 = vcmask 130048
    %v84 = vsel %vm83, %v75, 0
    %v86 = vsel %vm83, %v82, 0
    %88 = vmatpush.xpose.msra.mxu0 0.0
    %89 = vmatpush.xpose.msra.mxu0 0.0
    %90 = vmatpush.xpose.msra.mxu0 0.0
    %91 = vmatpush.xpose.msra.mxu0 0.0
    %92 = vmatpush.xpose.msra.mxu0 0.0
    %93 = vmatpush.xpose.msra.mxu0 0.0
    %94 = vmatpush.xpose.msra.mxu0 0.0
    %95 = vmatpush.xpose.msra.mxu0 0.0
    %96 = vmatpush.xpose.msra.mxu0 0.0
    %97 = vmatpush.xpose.msra.mxu0 0.0
    %98 = vmatpush.xpose.msra.mxu0 0.0
    %99 = vmatpush.xpose.msra.mxu0 0.0
    %100 = vmatpush.xpose.msra.mxu0 0.0
    %101 = vmatpush.xpose.msra.mxu0 0.0
    %102 = vmatpush.xpose.msra.mxu0 0.0
    %103 = vmatpush.xpose.msra.mxu0 %v86
    %104 = vmatmul.f32.gmra.mxu0 %v84
    %v105 = vpop.f32.mrf.mxu0
    %v106 = vadd.f32 0.0, %v105
    %107 = vdwg.mxu0
    %109 = vrot.lane.b32.xlu0 %v78, 112
    %v110 = vpop.permute.xlu0 %109
    %v111 = vsel %vm83, %v78, 0
    %v113 = vsel %vm83, %v110, 0
    %115 = vmatpush.xpose.msra.mxu0 0.0
    %116 = vmatpush.xpose.msra.mxu0 0.0
    %117 = vmatpush.xpose.msra.mxu0 0.0
    %118 = vmatpush.xpose.msra.mxu0 0.0
    %119 = vmatpush.xpose.msra.mxu0 0.0
    %120 = vmatpush.xpose.msra.mxu0 0.0
    %121 = vmatpush.xpose.msra.mxu0 0.0
    %122 = vmatpush.xpose.msra.mxu0 0.0
    %123 = vmatpush.xpose.msra.mxu0 0.0
    %124 = vmatpush.xpose.msra.mxu0 0.0
    %125 = vmatpush.xpose.msra.mxu0 0.0
    %126 = vmatpush.xpose.msra.mxu0 0.0
    %127 = vmatpush.xpose.msra.mxu0 0.0
    %128 = vmatpush.xpose.msra.mxu0 0.0
    %129 = vmatpush.xpose.msra.mxu0 0.0
    %130 = vmatpush.xpose.msra.mxu0 %v113
    %131 = vmatmul.f32.gmra.mxu0 %v111
    %v132 = vpop.f32.mrf.mxu0
    %v133 = vadd.f32 0.0, %v132
    %134 = vdwg.mxu0
    %v135 = vlaneseq
    %v136 = vshrl.u32 %v135, 7
    %v137 = vlaneseq
    %v138 = vand.u32 %v137, 127
    %vm139 = vcmp.le.s32.totalorder %v138, %v136
    %v140 = vsel %vm139, 1, 0
    %vm141 = vcmp.eq.s32.totalorder %v140, 1
    %v142 = vsel %vm141, %v106, -2.3819763e+38
    %v143 = vsel %vm141, %v133, -2.3819763e+38
    %vm144 = vcmask 64512
    %v145 = vsel %vm144, %v142, -inf
    %146 = vmax.xlane.f32.xlu0 %v145
    %v147 = vpop.xlane.xlu0 %146
    %v148 = vsel %vm144, %v143, -inf
    %149 = vmax.xlane.f32.xlu0 %v148
    %v150 = vpop.xlane.xlu0 %149
    %v151 = vsub.f32 %v142, %v147
    %v152 = vsub.f32 %v143, %v150
    %v153 = vmul.f32 %v151, 1.442695
    %v154 = vpow.pop %v153
    %v155 = vmul.f32 %v152, 1.442695
    %v156 = vpow.pop %v155
    %v157 = vsel %vm144, %v154, 0.0
    %158 = vadd.xlane.f32.xlu0 %v157
    %v159 = vpop.xlane.xlu0 %158
    %v160 = vsel %vm144, %v156, 0.0
    %161 = vadd.xlane.f32.xlu0 %v160
    %v162 = vpop.xlane.xlu0 %161
    %v163 = vrcp.pop %v159
    %v164 = vrcp.pop %v162
    %v165 = vmul.f32 %v154, %v163
    %v166 = vmul.f32 %v156, %v164
    %167 = vrot.lane.b32.xlu0 %v75, 96
    %v168 = vpop.permute.xlu0 %167
    %v171 = vsel %vm144, %v165, 0
    %173 = vmatpush.msra.mxu0 0.0
    %174 = vmatpush.msra.mxu0 0.0
    %175 = vmatpush.msra.mxu0 0.0
    %176 = vmatpush.msra.mxu0 0.0
    %177 = vmatpush.msra.mxu0 0.0
    %178 = vmatpush.msra.mxu0 0.0
    %179 = vmatpush.msra.mxu0 0.0
    %180 = vmatpush.msra.mxu0 0.0
    %181 = vmatpush.msra.mxu0 0.0
    %182 = vmatpush.msra.mxu0 0.0
    %183 = vmatpush.msra.mxu0 0.0
    %184 = vmatpush.msra.mxu0 0.0
    %185 = vmatpush.msra.mxu0 0.0
    %186 = vmatpush.msra.mxu0 0.0
    %187 = vmatpush.msra.mxu0 0.0
    %188 = vmatpush.msra.mxu0 %v168
    %189 = vmatmul.f32.gmra.mxu0 %v171
    %v190 = vpop.f32.mrf.mxu0
    %v191 = vadd.f32 0.0, %v190
    %192 = vdwg.mxu0
    %193 = vrot.lane.b32.xlu0 %v78, 96
    %v194 = vpop.permute.xlu0 %193
    %v197 = vsel %vm144, %v166, 0
    %199 = vmatpush.msra.mxu0 0.0
    %200 = vmatpush.msra.mxu0 0.0
    %201 = vmatpush.msra.mxu0 0.0
    %202 = vmatpush.msra.mxu0 0.0
    %203 = vmatpush.msra.mxu0 0.0
    %204 = vmatpush.msra.mxu0 0.0
    %205 = vmatpush.msra.mxu0 0.0
    %206 = vmatpush.msra.mxu0 0.0
    %207 = vmatpush.msra.mxu0 0.0
    %208 = vmatpush.msra.mxu0 0.0
    %209 = vmatpush.msra.mxu0 0.0
    %210 = vmatpush.msra.mxu0 0.0
    %211 = vmatpush.msra.mxu0 0.0
    %212 = vmatpush.msra.mxu0 0.0
    %213 = vmatpush.msra.mxu0 0.0
    %214 = vmatpush.msra.mxu0 %v194
    %215 = vmatmul.f32.gmra.mxu0 %v197
    %v216 = vpop.f32.mrf.mxu0
    %v217 = vadd.f32 0.0, %v216
    %218 = vdwg.mxu0
    %219 = vst.msk [vmem:[#allocation7] sm:$0xff] %vm83, %v191
    %220 = vst.msk [vmem:[#allocation7 + $0x8] sm:$0xff] %vm83, %v217
    // Predicated region
    $region18: #{tpu_custom_call.1} parent=1 // pred_check
      _
    $region19: #{tpu_custom_call.1} parent=1 // pred_check_branch
      %222 = sbr.rel (0) target = $region21
    $region20: #{tpu_custom_call.1} parent=1 // pred_region
      %224 = vsyncadd [#allocation4], 0
      %s225 = sshll.u32 [#allocation7], 4
      %s226 = int_to_ptr.vmem [resolvable:$true] %s225
      %s227 = sshll.u32 %s2, 4
      %s228 = int_to_ptr.hbm [resolvable:$true] %s227
      %233 = dma.vmem_to_hbm [thread:$0]  %s226, 256, %s228, [#allocation4], 128, 128, 8
    $region21: #{tpu_custom_call.1} parent=1 // pred_fallthru
      _
    // Predicated region
    $region22: #{tpu_custom_call.1} parent=1 // pred_check
      _
    $region23: #{tpu_custom_call.1} parent=1 // pred_check_branch
      %235 = sbr.rel (0) target = $region25
    $region24: #{tpu_custom_call.1} parent=1 // pred_region
      %237 = dma.done [#allocation4], 256
    $region25: #{tpu_custom_call.1} parent=1 // pred_fallthru
      _
    %238 = vsyncpa [#allocation3], 1
    %239 = vsyncpa [#allocation6], 1
    %240 = vsyncpa [#allocation4], 1

</llo_original>
